<compile_context>
chip_gen: v6e
topology: v6e:2x2x1
jax: 0.10.0
libtpu: 0.0.40
codegen_flags: <defaults>
</compile_context>

<pallas_src>
import jax
import jax.numpy as jnp
from jax.experimental import pallas as pl
from jax.experimental.pallas import tpu as pltpu

_LANE = 128
_MIN_TILE = 16                               # batch-tile granularity
_VMEM_PIPELINE_BUDGET = 16 * 1024 * 1024     # conservative across v5e/v6e/v7x


def _round_up(n, m):
    return ((n + m - 1) // m) * m


def _fused_mlp_sigmoid_kernel(x_ref, w1_ref, b1_ref, w2_ref, b2_ref, o_ref):
    # x: [TB, D] f32     w1: [D, Hp] bf16   b1: [1, Hp] f32
    # w2: [Hp, Kp] bf16  b2: [1, Kp] f32    o: [TB, Kp] (bf16 or f32)
    x = x_ref[...].astype(jnp.bfloat16)            # cast hides under MXU slack
    h = jnp.dot(x, w1_ref[...], preferred_element_type=jnp.float32)
    h = jnp.maximum(h + b1_ref[...], 0.0)          # bias + ReLU in f32
    logits = jnp.dot(h.astype(jnp.bfloat16), w2_ref[...],
                     preferred_element_type=jnp.float32) + b2_ref[...]
    o_ref[...] = jax.nn.sigmoid(logits).astype(o_ref.dtype)   # activation


def prepare_params(w1, b1, w2, b2):
    """One-time (model-build) padding + bf16 cast of the immutable weights.

    Pads H and K to lane width so the kernel's hidden tile and output stores
    are lane-dense; MXU operands are bf16, biases stay f32.
    """
    D, H = w1.shape
    K = w2.shape[1]
    Hp = _round_up(H, _LANE)
    Kp = _round_up(K, _LANE)
    w1p = jnp.zeros((D, Hp), jnp.float32).at[:, :H].set(w1).astype(jnp.bfloat16)
    b1p = jnp.zeros((1, Hp), jnp.float32).at[:, :H].set(jnp.reshape(b1, (1, H)))
    w2p = jnp.zeros((Hp, Kp), jnp.float32).at[:H, :K].set(w2).astype(jnp.bfloat16)
    b2p = jnp.zeros((1, Kp), jnp.float32).at[:, :K].set(jnp.reshape(b2, (1, K)))
    return {"w1": w1p, "b1": b1p, "w2": w2p, "b2": b2p,
            "D": D, "H": H, "K": K, "Hp": Hp, "Kp": Kp}


def _select_batch_tiling(B, D, Kp, out_itemsize, block_b):
    """Pick (TB, Bp): TB % 16 == 0, padding waste <= one tile, VMEM-budgeted,
    and >= 2 grid steps when the batch allows (megacore on v7x)."""
    # Double-buffered f32 x tile + double-buffered output tile per row.
    per_row = 2 * D * 4 + 2 * Kp * out_itemsize
    tb_cap = max(_MIN_TILE,
                 (_VMEM_PIPELINE_BUDGET // per_row) // _MIN_TILE * _MIN_TILE)
    tb_cap = min(tb_cap, max(_MIN_TILE, (block_b // _MIN_TILE) * _MIN_TILE))
    n_steps = pl.cdiv(B, tb_cap)
    if n_steps == 1 and B > _MIN_TILE:
        n_steps = 2                      # let the parallel axis use both TCs
    TB = _round_up(pl.cdiv(B, n_steps), _MIN_TILE)
    Bp = n_steps * TB
    return TB, Bp


def model_with_activation(x_bcl, params, *, block_b=512,
                          out_dtype=jnp.bfloat16):
    """Forward pass of ModelWithActivation: sigmoid(MLP(flatten(x)))."""
    B = x_bcl.shape[0]
    D, H, K = params["D"], params["H"], params["K"]
    Hp, Kp = params["Hp"], params["Kp"]
    out_itemsize = jnp.dtype(out_dtype).itemsize

    TB, Bp = _select_batch_tiling(B, D, Kp, out_itemsize, block_b)

    x = x_bcl.reshape(B, D)                          # glue: flatten (stays f32)
    if Bp != B:
        x = jnp.pad(x, ((0, Bp - B), (0, 0)))

    grid = (Bp // TB,)
    cost = pl.CostEstimate(
        flops=2 * Bp * (D * Hp + Hp * Kp),
        transcendentals=2 * Bp * Kp,                 # sigmoid ~ exp + recip
        bytes_accessed=(Bp * D * 4                   # x streamed as f32
                        + D * Hp * 2 + Hp * Kp * 2   # resident bf16 weights
                        + (Hp + Kp) * 4              # f32 biases
                        + Bp * Kp * out_itemsize),   # output writeback
    )

    out = pl.pallas_call(
        _fused_mlp_sigmoid_kernel,
        out_shape=jax.ShapeDtypeStruct((Bp, Kp), out_dtype),
        grid=grid,
        in_specs=[
            pl.BlockSpec((TB, D), lambda i: (i, 0)),     # x: pipelined rows
            pl.BlockSpec((D, Hp), lambda i: (0, 0)),     # w1: VMEM-resident
            pl.BlockSpec((1, Hp), lambda i: (0, 0)),     # b1
            pl.BlockSpec((Hp, Kp), lambda i: (0, 0)),    # w2
            pl.BlockSpec((1, Kp), lambda i: (0, 0)),     # b2
        ],
        out_specs=pl.BlockSpec((TB, Kp), lambda i: (i, 0)),
        compiler_params=pltpu.CompilerParams(
            dimension_semantics=("parallel",),           # both TCs on v7x
        ),
        cost_estimate=cost,
    )(x, params["w1"], params["b1"], params["w2"], params["b2"])

    return out[:B, :K]


def _init_linear(key, fan_in, fan_out):
    # Deterministic init matching nn.Linear's default U(-1/sqrt(fan_in), ...)
    kw, kb = jax.random.split(key)
    bound = 1.0 / jnp.sqrt(fan_in)
    w = jax.random.uniform(kw, (fan_in, fan_out), jnp.float32, -bound, bound)
    b = jax.random.uniform(kb, (1, fan_out), jnp.float32, -bound, bound)
    return w, b


if __name__ == "__main__":
    key = jax.random.PRNGKey(0)
    k_x, k_l1, k_l2 = jax.random.split(key, 3)

    # Small PTB-XL-like shapes: batch=8, 12 ECG leads, 16 time steps,
    # hidden=64, 5 diagnostic superclasses.
    B, C, L, H, K = 8, 12, 16, 64, 5
    D = C * L

    x = jax.random.normal(k_x, (B, C, L), jnp.float32)
    w1, b1 = _init_linear(k_l1, D, H)
    w2, b2 = _init_linear(k_l2, H, K)

    # Weight padding/casting happens ONCE here (model build), not per call.
    params = prepare_params(w1, b1, w2, b2)
    fwd = jax.jit(lambda xb: model_with_activation(xb, params))

    out = jax.block_until_ready(fwd(x))

    # Cross-check against a pure-JAX f32 reference of the same forward pass
    # (bf16 MXU operands + bf16 output store -> loose-ish tolerance).
    ref = jax.nn.sigmoid(
        jnp.maximum(x.reshape(B, D) @ w1 + b1, 0.0) @ w2 + b2
    )
    assert out.shape == (B, K)
    err = float(jnp.max(jnp.abs(out.astype(jnp.float32) - ref)))
    assert err < 2e-2, err

    print("KERNEL_OK")
</pallas_src>

<mosaic_0001>
module attributes {stable_mosaic.version = 11 : i64} {
  func.func @_fused_mlp_sigmoid_kernel(%arg0: i32, %arg1: memref<16x192xf32, #tpu.memory_space<vmem>>, %arg2: memref<192x128xbf16, #tpu.memory_space<vmem>>, %arg3: memref<1x128xf32, #tpu.memory_space<vmem>>, %arg4: memref<128x128xbf16, #tpu.memory_space<vmem>>, %arg5: memref<1x128xf32, #tpu.memory_space<vmem>>, %arg6: memref<16x128xbf16, #tpu.memory_space<vmem>>) attributes {dimension_semantics = [#tpu.dimension_semantics<parallel>], iteration_bounds = array<i64: 1>, scalar_prefetch = 0 : i64, scratch_operands = 0 : i64, tpu.core_type = #tpu.core_type<tc>, window_params = [{transform_indices = @transform_0, window_bounds = array<i64: 16, 192>}, {pipeline_mode = #tpu.pipeline_mode<synchronous>, transform_indices = @transform_1, window_bounds = array<i64: 192, 128>}, {pipeline_mode = #tpu.pipeline_mode<synchronous>, transform_indices = @transform_2, window_bounds = array<i64: 1, 128>}, {pipeline_mode = #tpu.pipeline_mode<synchronous>, transform_indices = @transform_3, window_bounds = array<i64: 128, 128>}, {pipeline_mode = #tpu.pipeline_mode<synchronous>, transform_indices = @transform_4, window_bounds = array<i64: 1, 128>}, {transform_indices = @transform_5, window_bounds = array<i64: 16, 128>}]} {
    %c0 = arith.constant 0 : index
    %c0_0 = arith.constant 0 : index
    %0 = vector.load %arg1[%c0, %c0_0] : memref<16x192xf32, #tpu.memory_space<vmem>>, vector<16x192xf32>
    %1 = arith.truncf %0 : vector<16x192xf32> to vector<16x192xbf16>
    %c0_1 = arith.constant 0 : index
    %c0_2 = arith.constant 0 : index
    %2 = vector.load %arg2[%c0_1, %c0_2] : memref<192x128xbf16, #tpu.memory_space<vmem>>, vector<192x128xbf16>
    %cst = arith.constant dense<0.000000e+00> : vector<16x128xf32>
    %3 = tpu.matmul %1, %2, %cst {dimension_numbers = #tpu.dot_dimension_numbers<[1], [0], [0], [1], [0, 0, 1, 1], [], []>} : vector<16x192xbf16>, vector<192x128xbf16>, vector<16x128xf32> -> vector<16x128xf32>
    %c0_3 = arith.constant 0 : index
    %c0_4 = arith.constant 0 : index
    %4 = vector.load %arg3[%c0_3, %c0_4] : memref<1x128xf32, #tpu.memory_space<vmem>>, vector<1x128xf32>
    %5 = vector.broadcast %4 : vector<1x128xf32> to vector<16x128xf32>
    %6 = arith.addf %3, %5 : vector<16x128xf32>
    %cst_5 = arith.constant 0.000000e+00 : f32
    %7 = vector.broadcast %cst_5 : f32 to vector<16x128xf32>
    %8 = arith.maximumf %6, %7 : vector<16x128xf32>
    %9 = arith.truncf %8 : vector<16x128xf32> to vector<16x128xbf16>
    %c0_6 = arith.constant 0 : index
    %c0_7 = arith.constant 0 : index
    %10 = vector.load %arg4[%c0_6, %c0_7] : memref<128x128xbf16, #tpu.memory_space<vmem>>, vector<128x128xbf16>
    %cst_8 = arith.constant dense<0.000000e+00> : vector<16x128xf32>
    %11 = tpu.matmul %9, %10, %cst_8 {dimension_numbers = #tpu.dot_dimension_numbers<[1], [0], [0], [1], [0, 0, 1, 1], [], []>} : vector<16x128xbf16>, vector<128x128xbf16>, vector<16x128xf32> -> vector<16x128xf32>
    %c0_9 = arith.constant 0 : index
    %c0_10 = arith.constant 0 : index
    %12 = vector.load %arg5[%c0_9, %c0_10] : memref<1x128xf32, #tpu.memory_space<vmem>>, vector<1x128xf32>
    %13 = vector.broadcast %12 : vector<1x128xf32> to vector<16x128xf32>
    %14 = arith.addf %11, %13 : vector<16x128xf32>
    %15 = arith.negf %14 : vector<16x128xf32>
    %16 = math.exp %15 : vector<16x128xf32>
    %cst_11 = arith.constant 1.000000e+00 : f32
    %17 = vector.broadcast %cst_11 : f32 to vector<16x128xf32>
    %18 = arith.addf %17, %16 : vector<16x128xf32>
    %19 = arith.divf %17, %18 : vector<16x128xf32>
    %20 = arith.truncf %19 : vector<16x128xf32> to vector<16x128xbf16>
    %c0_12 = arith.constant 0 : index
    %c0_13 = arith.constant 0 : index
    %21 = vector.load %arg6[%c0_12, %c0_13] : memref<16x128xbf16, #tpu.memory_space<vmem>>, vector<16x128xbf16>
    tpu.vector_store %arg6[%c0_12, %c0_13], %20 {strides = array<i32>} : memref<16x128xbf16, #tpu.memory_space<vmem>>, vector<16x128xbf16>,
    return
  }
  func.func @transform_0(%arg0: i32) -> (i32, i32) {
    %c0_i32 = arith.constant 0 : i32
    %c0_i32_0 = arith.constant 0 : i32
    return %arg0, %c0_i32 : i32, i32
  }
  func.func @transform_1(%arg0: i32) -> (i32, i32) {
    %c0_i32 = arith.constant 0 : i32
    %c0_i32_0 = arith.constant 0 : i32
    %c0_i32_1 = arith.constant 0 : i32
    return %c0_i32, %c0_i32_0 : i32, i32
  }
  func.func @transform_2(%arg0: i32) -> (i32, i32) {
    %c0_i32 = arith.constant 0 : i32
    %c0_i32_0 = arith.constant 0 : i32
    %c0_i32_1 = arith.constant 0 : i32
    return %c0_i32, %c0_i32_0 : i32, i32
  }
  func.func @transform_3(%arg0: i32) -> (i32, i32) {
    %c0_i32 = arith.constant 0 : i32
    %c0_i32_0 = arith.constant 0 : i32
    %c0_i32_1 = arith.constant 0 : i32
    return %c0_i32, %c0_i32_0 : i32, i32
  }
  func.func @transform_4(%arg0: i32) -> (i32, i32) {
    %c0_i32 = arith.constant 0 : i32
    %c0_i32_0 = arith.constant 0 : i32
    %c0_i32_1 = arith.constant 0 : i32
    return %c0_i32, %c0_i32_0 : i32, i32
  }
  func.func @transform_5(%arg0: i32) -> (i32, i32) {
    %c0_i32 = arith.constant 0 : i32
    %c0_i32_0 = arith.constant 0 : i32
    return %arg0, %c0_i32 : i32, i32
  }
}

</mosaic_0001>

<llo_original>
// kernel: _lambda_.1
$region0: #{_lambda_.1}
  #allocation0 [shape = 'u32[]', space=smem, size = 0x4, offset = 0x4, fixed_abs, tag = 'smem constant byte address 0x4 - core index']
  #allocation1 [shape = 'u32[144,128]{1,0:T(1,128)}', space=vmem, size = 0x12000, scoped, tag = 'internal scratch']
  %s0 = inlined_call_operand.vmem [shape: f32[16,192], index: 0, kind: input, shape index: {}]
  %s1 = inlined_call_operand.vmem [shape: bf16[192,128], index: 1, kind: input, shape index: {}]
  %s2 = inlined_call_operand.vmem [shape: f32[1,128], index: 2, kind: input, shape index: {}]
  %s3 = inlined_call_operand.vmem [shape: bf16[128,128], index: 3, kind: input, shape index: {}]
  %s4 = inlined_call_operand.vmem [shape: f32[1,128], index: 4, kind: input, shape index: {}]
  %s5 = inlined_call_operand.vmem [shape: bf16[16,128], index: 5, kind: output, shape index: {}]
  %s6 = sld [smem:[#allocation0]]
  $region30: #{_lambda_.1} parent=0
    _
  %s8 = ssub.s32 1, %s6
  %s9 = scalar_select 0, %s8, %s6
  // Predicated region
  $region2: #{_lambda_.1} parent=0 // pred_check
    _
  $region3: #{_lambda_.1} parent=0 // pred_check_branch
    %11 = sbr.rel (0) target = $region5
  $region4: #{_lambda_.1} parent=0 // pred_region
    _
  $region5: #{_lambda_.1} parent=0 // pred_fallthru
    _
  // Predicated region
  $region6: #{_lambda_.1} parent=0 // pred_check
    _
  $region7: #{_lambda_.1} parent=0 // pred_check_branch
    %13 = sbr.rel (0) target = $region9
  $region8: #{_lambda_.1} parent=0 // pred_region
    _
  $region9: #{_lambda_.1} parent=0 // pred_fallthru
    _
  // Predicated region
  $region10: #{_lambda_.1} parent=0 // pred_check
    _
  $region11: #{_lambda_.1} parent=0 // pred_check_branch
    %15 = sbr.rel (0) target = $region13
  $region12: #{_lambda_.1} parent=0 // pred_region
    _
  $region13: #{_lambda_.1} parent=0 // pred_fallthru
    _
  // Predicated region
  $region14: #{_lambda_.1} parent=0 // pred_check
    _
  $region15: #{_lambda_.1} parent=0 // pred_check_branch
    %17 = sbr.rel (0) target = $region17
  $region16: #{_lambda_.1} parent=0 // pred_region
    _
  $region17: #{_lambda_.1} parent=0 // pred_fallthru
    _
  // Predicated region
  $region18: #{_lambda_.1} parent=0 // pred_check
    _
  $region19: #{_lambda_.1} parent=0 // pred_check_branch
    %19 = sbr.rel (0) target = $region21
  $region20: #{_lambda_.1} parent=0 // pred_region
    _
  $region21: #{_lambda_.1} parent=0 // pred_fallthru
    _
  %v21 = vld [vmem:[%s0] sm:$0xff]
  %v22 = vld [vmem:[%s0 + $0x8] sm:$0xff]
  %v23 = vld [vmem:[%s0 + $0x10] sm:$0xff]
  %v24 = vld [vmem:[%s0 + $0x18] sm:$0xff]
  %v25 = vpack.c.bf16 %v23, %v21
  %v26 = vpack.c.bf16 %v24, %v22
  %v27 = vld [vmem:[%s1] sm:$0xf]
  %v28 = vld [vmem:[%s1 + $0x4] sm:$0xf]
  %v29 = vld [vmem:[%s1 + $0x8] sm:$0xf]
  %v30 = vld [vmem:[%s1 + $0xc] sm:$0xf]
  %v31 = vld [vmem:[%s1 + $0x10] sm:$0xf]
  %v32 = vld [vmem:[%s1 + $0x14] sm:$0xf]
  %v33 = vld [vmem:[%s1 + $0x18] sm:$0xf]
  %v34 = vld [vmem:[%s1 + $0x1c] sm:$0xf]
  %v35 = vld [vmem:[%s1 + $0x20] sm:$0xf]
  %v36 = vld [vmem:[%s1 + $0x24] sm:$0xf]
  %v37 = vld [vmem:[%s1 + $0x28] sm:$0xf]
  %v38 = vld [vmem:[%s1 + $0x2c] sm:$0xf]
  %v39 = vld [vmem:[%s1 + $0x30] sm:$0xf]
  %v40 = vld [vmem:[%s1 + $0x34] sm:$0xf]
  %v41 = vld [vmem:[%s1 + $0x38] sm:$0xf]
  %v42 = vld [vmem:[%s1 + $0x3c] sm:$0xf]
  %v43 = vld [vmem:[%s1 + $0x40] sm:$0xf]
  %v44 = vld [vmem:[%s1 + $0x44] sm:$0xf]
  %v45 = vld [vmem:[%s1 + $0x48] sm:$0xf]
  %v46 = vld [vmem:[%s1 + $0x4c] sm:$0xf]
  %v47 = vld [vmem:[%s1 + $0x50] sm:$0xf]
  %v48 = vld [vmem:[%s1 + $0x54] sm:$0xf]
  %v49 = vld [vmem:[%s1 + $0x58] sm:$0xf]
  %v50 = vld [vmem:[%s1 + $0x5c] sm:$0xf]
  %v51 = vld [vmem:[%s2] sm:$0x1]
  %v53 = vlaneseq
  %v54 = vshrl.u32 %v53, 7
  %v55 = vsub.s32 0, %v54
  %v56 = vrot.slane %v51, %v55
  %v82 = vunpack.c.l.b16 %v27
  %v83 = vunpack.c.l.b16 %v28
  %v84 = vunpack.c.l.b16 %v29
  %v85 = vunpack.c.l.b16 %v30
  %v86 = vunpack.c.l.b16 %v31
  %v87 = vunpack.c.l.b16 %v32
  %v88 = vunpack.c.l.b16 %v33
  %v89 = vunpack.c.l.b16 %v34
  %v90 = vunpack.c.l.b16 %v35
  %v91 = vunpack.c.l.b16 %v36
  %v92 = vunpack.c.l.b16 %v37
  %v93 = vunpack.c.l.b16 %v38
  %v94 = vunpack.c.l.b16 %v39
  %v95 = vunpack.c.l.b16 %v40
  %v96 = vunpack.c.l.b16 %v41
  %v97 = vunpack.c.l.b16 %v42
  %v98 = vunpack.c.l.b16 %v43
  %v99 = vunpack.c.l.b16 %v44
  %v100 = vunpack.c.l.b16 %v45
  %v101 = vunpack.c.l.b16 %v46
  %v102 = vunpack.c.l.b16 %v47
  %v103 = vunpack.c.l.b16 %v48
  %v104 = vunpack.c.l.b16 %v49
  %v105 = vunpack.c.l.b16 %v50
  %v106 = vpack.c.b16 %v83, %v82
  %v107 = vpack.c.b16 %v85, %v84
  %v108 = vpack.c.b16 %v87, %v86
  %v109 = vpack.c.b16 %v89, %v88
  %v110 = vpack.c.b16 %v91, %v90
  %v111 = vpack.c.b16 %v93, %v92
  %v112 = vpack.c.b16 %v95, %v94
  %v113 = vpack.c.b16 %v97, %v96
  %v114 = vpack.c.b16 %v99, %v98
  %v115 = vpack.c.b16 %v101, %v100
  %v116 = vpack.c.b16 %v103, %v102
  %v117 = vpack.c.b16 %v105, %v104
  %vm130 = vcmask 523264
  %v132 = vsel %vm130, %v26, 0
  %134 = vmatprep.subr.bf16.mxu0 0
  %135 = vmatpush1.bf16.msra.mxu0 %v113
  %136 = vmatprep.subr.bf16.mxu0 0
  %137 = vmatpush1.bf16.msra.mxu0 %v112
  %138 = vmatprep.subr.bf16.mxu0 0
  %139 = vmatpush1.bf16.msra.mxu0 %v111
  %140 = vmatprep.subr.bf16.mxu0 0
  %141 = vmatpush1.bf16.msra.mxu0 %v110
  %142 = vmatprep.subr.bf16.mxu0 0
  %143 = vmatpush1.bf16.msra.mxu0 %v109
  %144 = vmatprep.subr.bf16.mxu0 0
  %145 = vmatpush1.bf16.msra.mxu0 %v108
  %146 = vmatprep.subr.bf16.mxu0 0
  %147 = vmatpush1.bf16.msra.mxu0 %v107
  %148 = vmatprep.subr.bf16.mxu0 0
  %149 = vmatpush1.bf16.msra.mxu0 %v106
  %150 = vmatprep.subr.bf16.mxu0 0
  %151 = vmatpush2.bf16.msra.mxu0 0
  %152 = vmatprep.subr.bf16.mxu0 0
  %153 = vmatpush2.bf16.msra.mxu0 0
  %154 = vmatprep.subr.bf16.mxu0 0
  %155 = vmatpush2.bf16.msra.mxu0 0
  %156 = vmatprep.subr.bf16.mxu0 0
  %157 = vmatpush2.bf16.msra.mxu0 0
  %158 = vmatprep.subr.bf16.mxu0 0
  %159 = vmatpush2.bf16.msra.mxu0 %v117
  %160 = vmatprep.subr.bf16.mxu0 0
  %161 = vmatpush2.bf16.msra.mxu0 %v116
  %162 = vmatprep.subr.bf16.mxu0 0
  %163 = vmatpush2.bf16.msra.mxu0 %v115
  %164 = vmatprep.subr.bf16.mxu0 0
  %165 = vmatpush2.bf16.msra.mxu0 %v114
  %166 = vmatprep.mubr.bf16.mxu0 %v132
  %167 = vmatmul.mubr.bf16.gmra.mxu0 %v25
  %v168 = vpop.f32.mrf.mxu0
  %v169 = vadd.f32 %v56, %v168
  %v170 = vpop.f32.mrf.mxu0
  %v171 = vpop.f32.mrf.mxu0
  %v172 = vadd.f32 %v56, %v171
  %v173 = vpop.f32.mrf.mxu0
  %174 = vdwg.mxu0
  %v175 = vmax.f32 %v169, 0.0
  %v176 = vmax.f32 %v172, 0.0
  %v177 = vpack.c.bf16 %v176, %v175
  %v178 = vld [vmem:[%s3] sm:$0xf]
  %v179 = vld [vmem:[%s3 + $0x4] sm:$0xf]
  %v180 = vld [vmem:[%s3 + $0x8] sm:$0xf]
  %v181 = vld [vmem:[%s3 + $0xc] sm:$0xf]
  %v182 = vld [vmem:[%s3 + $0x10] sm:$0xf]
  %v183 = vld [vmem:[%s3 + $0x14] sm:$0xf]
  %v184 = vld [vmem:[%s3 + $0x18] sm:$0xf]
  %v185 = vld [vmem:[%s3 + $0x1c] sm:$0xf]
  %v186 = vld [vmem:[%s3 + $0x20] sm:$0xf]
  %v187 = vld [vmem:[%s3 + $0x24] sm:$0xf]
  %v188 = vld [vmem:[%s3 + $0x28] sm:$0xf]
  %v189 = vld [vmem:[%s3 + $0x2c] sm:$0xf]
  %v190 = vld [vmem:[%s3 + $0x30] sm:$0xf]
  %v191 = vld [vmem:[%s3 + $0x34] sm:$0xf]
  %v192 = vld [vmem:[%s3 + $0x38] sm:$0xf]
  %v193 = vld [vmem:[%s3 + $0x3c] sm:$0xf]
  %v194 = vld [vmem:[%s4] sm:$0x1]
  %v196 = vlaneseq
  %v197 = vshrl.u32 %v196, 7
  %v198 = vsub.s32 0, %v197
  %v199 = vrot.slane %v194, %v198
  %v217 = vunpack.c.l.b16 %v178
  %v218 = vunpack.c.l.b16 %v179
  %v219 = vunpack.c.l.b16 %v180
  %v220 = vunpack.c.l.b16 %v181
  %v221 = vunpack.c.l.b16 %v182
  %v222 = vunpack.c.l.b16 %v183
  %v223 = vunpack.c.l.b16 %v184
  %v224 = vunpack.c.l.b16 %v185
  %v225 = vunpack.c.l.b16 %v186
  %v226 = vunpack.c.l.b16 %v187
  %v227 = vunpack.c.l.b16 %v188
  %v228 = vunpack.c.l.b16 %v189
  %v229 = vunpack.c.l.b16 %v190
  %v230 = vunpack.c.l.b16 %v191
  %v231 = vunpack.c.l.b16 %v192
  %v232 = vunpack.c.l.b16 %v193
  %v233 = vpack.c.b16 %v218, %v217
  %v234 = vpack.c.b16 %v220, %v219
  %v235 = vpack.c.b16 %v222, %v221
  %v236 = vpack.c.b16 %v224, %v223
  %v237 = vpack.c.b16 %v226, %v225
  %v238 = vpack.c.b16 %v228, %v227
  %v239 = vpack.c.b16 %v230, %v229
  %v240 = vpack.c.b16 %v232, %v231
  %249 = vmatprep.subr.bf16.mxu0 0
  %250 = vmatpush1.bf16.msra.mxu0 %v240
  %251 = vmatprep.subr.bf16.mxu0 0
  %252 = vmatpush1.bf16.msra.mxu0 %v239
  %253 = vmatprep.subr.bf16.mxu0 0
  %254 = vmatpush1.bf16.msra.mxu0 %v238
  %255 = vmatprep.subr.bf16.mxu0 0
  %256 = vmatpush1.bf16.msra.mxu0 %v237
  %257 = vmatprep.subr.bf16.mxu0 0
  %258 = vmatpush1.bf16.msra.mxu0 %v236
  %259 = vmatprep.subr.bf16.mxu0 0
  %260 = vmatpush1.bf16.msra.mxu0 %v235
  %261 = vmatprep.subr.bf16.mxu0 0
  %262 = vmatpush1.bf16.msra.mxu0 %v234
  %263 = vmatprep.subr.bf16.mxu0 0
  %264 = vmatpush1.bf16.msra.mxu0 %v233
  %265 = vmatprep.subr.bf16.mxu0 0
  %266 = vmatpush2.bf16.msra.mxu0 0
  %267 = vmatprep.subr.bf16.mxu0 0
  %268 = vmatpush2.bf16.msra.mxu0 0
  %269 = vmatprep.subr.bf16.mxu0 0
  %270 = vmatpush2.bf16.msra.mxu0 0
  %271 = vmatprep.subr.bf16.mxu0 0
  %272 = vmatpush2.bf16.msra.mxu0 0
  %273 = vmatprep.subr.bf16.mxu0 0
  %274 = vmatpush2.bf16.msra.mxu0 0
  %275 = vmatprep.subr.bf16.mxu0 0
  %276 = vmatpush2.bf16.msra.mxu0 0
  %277 = vmatprep.subr.bf16.mxu0 0
  %278 = vmatpush2.bf16.msra.mxu0 0
  %279 = vmatprep.subr.bf16.mxu0 0
  %280 = vmatpush2.bf16.msra.mxu0 0
  %281 = vmatprep.mubr.bf16.mxu0 0
  %282 = vmatmul.mubr.bf16.gmra.mxu0 %v177
  %v283 = vpop.f32.mrf.mxu0
  %v284 = vadd.f32 %v199, %v283
  %v285 = vpop.f32.mrf.mxu0
  %v286 = vpop.f32.mrf.mxu0
  %v287 = vadd.f32 %v199, %v286
  %v288 = vpop.f32.mrf.mxu0
  %289 = vdwg.mxu0
  %v290 = vxor.u32 %v284, 2147483648
  %v291 = vxor.u32 %v287, 2147483648
  %v292 = vmul.f32 %v290, 1.442695
  %v293 = vpow.pop %v292
  %v294 = vmul.f32 %v291, 1.442695
  %v295 = vpow.pop %v294
  %v296 = vadd.f32 %v293, 1.0
  %v297 = vadd.f32 %v295, 1.0
  %v298 = vrcp.pop %v296
  %v299 = vmul.f32 1.0, %v298
  %v300 = vrcp.pop %v297
  %v301 = vmul.f32 1.0, %v300
  %v302 = vpack.c.bf16 %v301, %v299
  %v304 = vunpack.c.l.b16 %v302
  %v305 = vunpack.c.h.b16 %v302
  %v306 = vpack.c.b16 %v304, %v304
  %v307 = vpack.c.b16 %v305, %v305
  %310 = vst [vmem:[%s5] sm:$0xf] %v306
  %311 = vst [vmem:[%s5 + $0x4] sm:$0xf] %v307
  // Predicated region
  $region22: #{_lambda_.1} parent=0 // pred_check
    _
  $region23: #{_lambda_.1} parent=0 // pred_check_branch
    %313 = sbr.rel (0) target = $region25
  $region24: #{_lambda_.1} parent=0 // pred_region
    _
  $region25: #{_lambda_.1} parent=0 // pred_fallthru
    _
  // Predicated region
  $region26: #{_lambda_.1} parent=0 // pred_check
    _
  $region27: #{_lambda_.1} parent=0 // pred_check_branch
    %315 = sbr.rel (0) target = $region29
  $region28: #{_lambda_.1} parent=0 // pred_region
    _
  $region29: #{_lambda_.1} parent=0 // pred_fallthru
    _

</llo_original>
